<compile_context>
chip_gen: v6e
topology: v6e:2x2x1
jax: 0.10.0
libtpu: 0.0.40
codegen_flags: <defaults>
</compile_context>

<pallas_src>
import math

import jax
import jax.numpy as jnp
from jax import lax
from jax.experimental import pallas as pl
from jax.experimental.pallas import tpu as pltpu


def _round_up(n, m):
    return ((n + m - 1) // m) * m


def _layernorm_kernel(w_ref, b_ref, x_ref, o_ref, *, eps):
    # w_ref/b_ref: VMEM (1, C); x_ref/o_ref: VMEM (row_block, C)
    x = x_ref[...].astype(jnp.float32)
    mean = jnp.mean(x, axis=-1, keepdims=True)
    xc = x - mean
    var = jnp.mean(xc * xc, axis=-1, keepdims=True)
    inv = lax.rsqrt(var + eps)                       # EUP; off the VPU slot
    y = xc * inv * w_ref[...].astype(jnp.float32) + b_ref[...].astype(jnp.float32)
    o_ref[...] = y.astype(o_ref.dtype)


def layer_norm(x, weight, bias=None, *, eps=1e-5, row_block=None):
    """LayerNorm over the last dim. x: (..., C); weight/bias: (C,)."""
    orig_shape = x.shape
    C = orig_shape[-1]
    rows = math.prod(orig_shape[:-1])
    x2d = x.reshape(rows, C)

    # bias=False in the module -> no additive term; substitute zeros (identical math).
    if bias is None:
        bias = jnp.zeros((C,), dtype=weight.dtype)

    w2d = weight.reshape(1, C)
    b2d = bias.reshape(1, C)

    if row_block is None:
        # Memory-bound kernel: pick the largest row tile that keeps
        # x + out, double-buffered, well inside the scoped VMEM budget on
        # every generation (v7x has only 64 MiB physical / 32 MiB scoped).
        itemsize = jnp.dtype(x.dtype).itemsize
        vmem_budget = 8 * 1024 * 1024          # 2 bufs * (x + out) <= 8 MiB
        rb = vmem_budget // (4 * C * itemsize)
        rb = max(8, min(1024, int(rb)))        # keep the grid non-degenerate
        rb = min(rb, _round_up(rows, 8))       # don't exceed the problem size
        row_block = _round_up(rb, 8)           # sublane multiple

    # Pad rows instead of asserting divisibility; padded rows are sliced off.
    padded_rows = _round_up(rows, row_block)
    if padded_rows != rows:
        x2d = jnp.pad(x2d, ((0, padded_rows - rows), (0, 0)))

    grid = (padded_rows // row_block,)

    kernel = lambda w, b, xr, orf: _layernorm_kernel(w, b, xr, orf, eps=eps)

    out2d = pl.pallas_call(
        kernel,
        out_shape=jax.ShapeDtypeStruct((padded_rows, C), x.dtype),
        grid_spec=pltpu.PrefetchScalarGridSpec(
            num_scalar_prefetch=0,
            grid=grid,
            in_specs=[
                pl.BlockSpec((1, C), lambda i: (0, 0)),          # weight (resident)
                pl.BlockSpec((1, C), lambda i: (0, 0)),          # bias   (resident)
                pl.BlockSpec((row_block, C), lambda i: (i, 0)),  # x tile
            ],
            out_specs=pl.BlockSpec((row_block, C), lambda i: (i, 0)),
        ),
        compiler_params=pltpu.CompilerParams(
            dimension_semantics=("parallel",),
            vmem_limit_bytes=32 * 1024 * 1024,
        ),
    )(w2d, b2d, x2d)

    if padded_rows != rows:
        out2d = out2d[:rows]
    return out2d.reshape(orig_shape)


if __name__ == "__main__":
    # Small shapes consistent with the module: batch=2, seq=8, n_embd=32
    B, T, C = 2, 8, 32
    key = jax.random.PRNGKey(0)
    kx, kw, kb = jax.random.split(key, 3)

    x = jax.random.normal(kx, (B, T, C), dtype=jnp.float32)

    # Module init is weight=1, bias=0; perturb deterministically so the
    # scale/shift broadcast paths are actually exercised.
    weight = jnp.ones((C,), jnp.float32) + 0.1 * jax.random.normal(kw, (C,), jnp.float32)
    bias = 0.1 * jax.random.normal(kb, (C,), jnp.float32)

    out = layer_norm(x, weight, bias, eps=1e-5)
    out = jax.block_until_ready(out)

    # Pure-JAX reference (F.layer_norm semantics: biased variance over last dim)
    mean = jnp.mean(x, axis=-1, keepdims=True)
    var = jnp.mean((x - mean) ** 2, axis=-1, keepdims=True)
    ref = (x - mean) / jnp.sqrt(var + 1e-5) * weight + bias

    assert out.shape == (B, T, C)
    assert jnp.allclose(out, ref, atol=1e-5, rtol=1e-5), "mismatch vs reference"

    # Also exercise the bias=False path (module's optional bias)
    out_nb = jax.block_until_ready(layer_norm(x, weight, None, eps=1e-5))
    ref_nb = (x - mean) / jnp.sqrt(var + 1e-5) * weight
    assert jnp.allclose(out_nb, ref_nb, atol=1e-5, rtol=1e-5), "mismatch (no bias)"

    print("KERNEL_OK")
</pallas_src>

<mosaic_0001>
module attributes {stable_mosaic.version = 11 : i64} {
  func.func @_lambda_(%arg0: i32, %arg1: memref<1x32xf32, #tpu.memory_space<vmem>>, %arg2: memref<1x32xf32, #tpu.memory_space<vmem>>, %arg3: memref<16x32xf32, #tpu.memory_space<vmem>>, %arg4: memref<16x32xf32, #tpu.memory_space<vmem>>) attributes {dimension_semantics = [#tpu.dimension_semantics<parallel>], iteration_bounds = array<i64: 1>, scalar_prefetch = 0 : i64, scratch_operands = 0 : i64, tpu.core_type = #tpu.core_type<tc>, window_params = [{pipeline_mode = #tpu.pipeline_mode<synchronous>, transform_indices = @transform_0, window_bounds = array<i64: 1, 32>}, {pipeline_mode = #tpu.pipeline_mode<synchronous>, transform_indices = @transform_1, window_bounds = array<i64: 1, 32>}, {transform_indices = @transform_2, window_bounds = array<i64: 16, 32>}, {transform_indices = @transform_3, window_bounds = array<i64: 16, 32>}]} {
    %c0 = arith.constant 0 : index
    %c0_0 = arith.constant 0 : index
    %0 = vector.load %arg3[%c0, %c0_0] : memref<16x32xf32, #tpu.memory_space<vmem>>, vector<16x32xf32>
    %cst = arith.constant dense<0.000000e+00> : vector<16xf32>
    %1 = vector.multi_reduction <add>, %0, %cst [1] : vector<16x32xf32> to vector<16xf32>
    %2 = vector.shape_cast %1 : vector<16xf32> to vector<16x1xf32>
    %cst_1 = arith.constant 3.200000e+01 : f32
    %3 = vector.broadcast %cst_1 : f32 to vector<16x1xf32>
    %4 = arith.divf %2, %3 : vector<16x1xf32>
    %5 = vector.broadcast %4 : vector<16x1xf32> to vector<16x32xf32>
    %6 = arith.subf %0, %5 : vector<16x32xf32>
    %7 = arith.mulf %6, %6 : vector<16x32xf32>
    %cst_2 = arith.constant dense<0.000000e+00> : vector<16xf32>
    %8 = vector.multi_reduction <add>, %7, %cst_2 [1] : vector<16x32xf32> to vector<16xf32>
    %9 = vector.shape_cast %8 : vector<16xf32> to vector<16x1xf32>
    %cst_3 = arith.constant 3.200000e+01 : f32
    %10 = vector.broadcast %cst_3 : f32 to vector<16x1xf32>
    %11 = arith.divf %9, %10 : vector<16x1xf32>
    %cst_4 = arith.constant 9.99999974E-6 : f32
    %12 = vector.broadcast %cst_4 : f32 to vector<16x1xf32>
    %13 = arith.addf %11, %12 : vector<16x1xf32>
    %14 = math.rsqrt %13 : vector<16x1xf32>
    %15 = vector.broadcast %14 : vector<16x1xf32> to vector<16x32xf32>
    %16 = arith.mulf %6, %15 : vector<16x32xf32>
    %c0_5 = arith.constant 0 : index
    %c0_6 = arith.constant 0 : index
    %17 = vector.load %arg1[%c0_5, %c0_6] : memref<1x32xf32, #tpu.memory_space<vmem>>, vector<1x32xf32>
    %18 = vector.broadcast %17 : vector<1x32xf32> to vector<16x32xf32>
    %19 = arith.mulf %16, %18 : vector<16x32xf32>
    %c0_7 = arith.constant 0 : index
    %c0_8 = arith.constant 0 : index
    %20 = vector.load %arg2[%c0_7, %c0_8] : memref<1x32xf32, #tpu.memory_space<vmem>>, vector<1x32xf32>
    %21 = vector.broadcast %20 : vector<1x32xf32> to vector<16x32xf32>
    %22 = arith.addf %19, %21 : vector<16x32xf32>
    %c0_9 = arith.constant 0 : index
    %c0_10 = arith.constant 0 : index
    %23 = vector.load %arg4[%c0_9, %c0_10] : memref<16x32xf32, #tpu.memory_space<vmem>>, vector<16x32xf32>
    tpu.vector_store %arg4[%c0_9, %c0_10], %22 {strides = array<i32>} : memref<16x32xf32, #tpu.memory_space<vmem>>, vector<16x32xf32>,
    return
  }
  func.func @transform_0(%arg0: i32) -> (i32, i32) {
    %c0_i32 = arith.constant 0 : i32
    %c0_i32_0 = arith.constant 0 : i32
    %c0_i32_1 = arith.constant 0 : i32
    return %c0_i32, %c0_i32_0 : i32, i32
  }
  func.func @transform_1(%arg0: i32) -> (i32, i32) {
    %c0_i32 = arith.constant 0 : i32
    %c0_i32_0 = arith.constant 0 : i32
    %c0_i32_1 = arith.constant 0 : i32
    return %c0_i32, %c0_i32_0 : i32, i32
  }
  func.func @transform_2(%arg0: i32) -> (i32, i32) {
    %c0_i32 = arith.constant 0 : i32
    %c0_i32_0 = arith.constant 0 : i32
    return %arg0, %c0_i32 : i32, i32
  }
  func.func @transform_3(%arg0: i32) -> (i32, i32) {
    %c0_i32 = arith.constant 0 : i32
    %c0_i32_0 = arith.constant 0 : i32
    return %arg0, %c0_i32 : i32, i32
  }
}

</mosaic_0001>

<llo_original>
// kernel: tpu_custom_call.1
$region0: #{tpu_custom_call.1}
  #allocation0 [shape = 'u32[]', space=smem, size = 0x4, offset = 0x4, fixed_abs, tag = 'smem constant byte address 0x4 - core index']
  #allocation1 [shape = 'u32[144,128]{1,0:T(1,128)}', space=vmem, size = 0x12000, scoped, tag = 'internal scratch']
  %s0 = inlined_call_operand.hbm [shape: f32[1,32], index: 0, kind: input, shape index: {}]
  %s1 = inlined_call_operand.vmem [shape: f32[1,32], index: 1, kind: input, shape index: {}]
  %s2 = inlined_call_operand.hbm [shape: f32[16,32], index: 2, kind: input, shape index: {}]
  %s3 = inlined_call_operand.hbm [shape: f32[16,32], index: 3, kind: output, shape index: {}]
  %s4 = sld [smem:[#allocation0]]
  $region30: #{tpu_custom_call.1} parent=0
    _
  %s6 = ssub.s32 1, %s4
  %s7 = scalar_select 0, %s6, %s4
  $region1: #{tpu_custom_call.1} parent=0
    #allocation2 [shape = 'u8[512]{0}', space=vmem, size = 0x400, scoped, tag = 'input window, operand 0, single buffered']
    #allocation3 [shape = 's32[1]{0}', space=sflag, size = 0x4, scoped, tag = 'scoped memory for tpu_custom_call.1']
    #allocation4 [shape = 's32[1]{0}', space=sflag, size = 0x4, scoped, tag = 'scoped memory for tpu_custom_call.1']
    #allocation5 [shape = 'u8[8192]{0}', space=vmem, size = 0x2000, scoped, tag = 'input window, operand 2, single buffered']
    #allocation6 [shape = 's32[1]{0}', space=sflag, size = 0x4, scoped, tag = 'scoped memory for tpu_custom_call.1']
    #allocation7 [shape = 'u8[8192]{0}', space=vmem, size = 0x2000, scoped, tag = 'output window, operand 0, single buffered']
    %8 = vsyncpa [#allocation3], 0
    %9 = vsyncpa [#allocation6], 0
    %10 = vsyncpa [#allocation4], 0
    // Predicated region
    $region2: #{tpu_custom_call.1} parent=1 // pred_check
      _
    $region3: #{tpu_custom_call.1} parent=1 // pred_check_branch
      %12 = sbr.rel (0) target = $region5
    $region4: #{tpu_custom_call.1} parent=1 // pred_region
      %s14 = ssub.s32 16, 16
      %15 = vsyncadd [#allocation3], %s14
      %s17 = sshll.u32 [#allocation2], 4
      %s18 = int_to_ptr.vmem [resolvable:$true] %s17
      %20 = dma.hbm_to_vmem [thread:$0]  %s0, 16, %s18, [#allocation3]
    $region5: #{tpu_custom_call.1} parent=1 // pred_fallthru
      _
    // Predicated region
    $region6: #{tpu_custom_call.1} parent=1 // pred_check
      _
    $region7: #{tpu_custom_call.1} parent=1 // pred_check_branch
      %22 = sbr.rel (0) target = $region9
    $region8: #{tpu_custom_call.1} parent=1 // pred_region
      _
    $region9: #{tpu_custom_call.1} parent=1 // pred_fallthru
      _
    // Predicated region
    $region10: #{tpu_custom_call.1} parent=1 // pred_check
      _
    $region11: #{tpu_custom_call.1} parent=1 // pred_check_branch
      %24 = sbr.rel (0) target = $region13
    $region12: #{tpu_custom_call.1} parent=1 // pred_region
      %s26 = ssub.s32 256, 256
      %27 = vsyncadd [#allocation6], %s26
      %s28 = sshll.u32 [#allocation5], 4
      %s29 = int_to_ptr.vmem [resolvable:$true] %s28
      %34 = dma.hbm_to_vmem [thread:$0]  %s2, 256, %s29, [#allocation6], 128, 128, 8
    $region13: #{tpu_custom_call.1} parent=1 // pred_fallthru
      _
    // Predicated region
    $region14: #{tpu_custom_call.1} parent=1 // pred_check
      _
    $region15: #{tpu_custom_call.1} parent=1 // pred_check_branch
      %36 = sbr.rel (0) target = $region17
    $region16: #{tpu_custom_call.1} parent=1 // pred_region
      %37 = dma.done [#allocation3], 16
    $region17: #{tpu_custom_call.1} parent=1 // pred_fallthru
      _
    // Predicated region
    $region18: #{tpu_custom_call.1} parent=1 // pred_check
      _
    $region19: #{tpu_custom_call.1} parent=1 // pred_check_branch
      %39 = sbr.rel (0) target = $region21
    $region20: #{tpu_custom_call.1} parent=1 // pred_region
      %40 = dma.done [#allocation6], 256
    $region21: #{tpu_custom_call.1} parent=1 // pred_fallthru
      _
    %v41 = vld [vmem:[#allocation5] sm:$0xff]
    %v42 = vld [vmem:[#allocation5 + $0x8] sm:$0xff]
    %vm43 = vcmask 261120
    %v44 = vsel %vm43, %v41, 0.0
    %45 = vadd.xlane.f32.xlu0 %v44
    %v46 = vpop.xlane.xlu0 %45
    %v47 = vsel %vm43, %v42, 0.0
    %48 = vadd.xlane.f32.xlu0 %v47
    %v49 = vpop.xlane.xlu0 %48
    %v50 = vrcp.pop 32.0
    %v51 = vmul.f32 %v46, %v50
    %v52 = vmul.f32 %v49, %v50
    %v53 = vsub.f32 %v41, %v51
    %v54 = vsub.f32 %v42, %v52
    %v55 = vmul.f32 %v53, %v53
    %v56 = vmul.f32 %v54, %v54
    %v57 = vsel %vm43, %v55, 0.0
    %58 = vadd.xlane.f32.xlu0 %v57
    %v59 = vpop.xlane.xlu0 %58
    %v60 = vsel %vm43, %v56, 0.0
    %61 = vadd.xlane.f32.xlu0 %v60
    %v62 = vpop.xlane.xlu0 %61
    %v63 = vmul.f32 %v59, %v50
    %v64 = vmul.f32 %v62, %v50
    %v65 = vadd.f32 %v63, 1e-05
    %v66 = vadd.f32 %v64, 1e-05
    %v67 = vrsqrt.pop %v65
    %v68 = vrsqrt.pop %v66
    %v69 = vmul.f32 %v53, %v67
    %v70 = vmul.f32 %v54, %v68
    %v71 = vld [vmem:[#allocation2] sm:$0x1]
    %v73 = vlaneseq
    %v74 = vshrl.u32 %v73, 7
    %v75 = vsub.s32 0, %v74
    %v76 = vrot.slane %v71, %v75
    %v78 = vmul.f32 %v69, %v76
    %v79 = vmul.f32 %v70, %v76
    %v80 = vld [vmem:[%s1] sm:$0x1]
    %v82 = vlaneseq
    %v83 = vshrl.u32 %v82, 7
    %v84 = vsub.s32 0, %v83
    %v85 = vrot.slane %v80, %v84
    %v87 = vadd.f32 %v78, %v85
    %v88 = vadd.f32 %v79, %v85
    %89 = vst.msk [vmem:[#allocation7] sm:$0xff] %vm43, %v87
    %90 = vst.msk [vmem:[#allocation7 + $0x8] sm:$0xff] %vm43, %v88
    // Predicated region
    $region22: #{tpu_custom_call.1} parent=1 // pred_check
      _
    $region23: #{tpu_custom_call.1} parent=1 // pred_check_branch
      %92 = sbr.rel (0) target = $region25
    $region24: #{tpu_custom_call.1} parent=1 // pred_region
      %s94 = ssub.s32 256, 256
      %95 = vsyncadd [#allocation4], %s94
      %s96 = sshll.u32 [#allocation7], 4
      %s97 = int_to_ptr.vmem [resolvable:$true] %s96
      %102 = dma.vmem_to_hbm [thread:$0]  %s97, 256, %s3, [#allocation4], 128, 128, 8
    $region25: #{tpu_custom_call.1} parent=1 // pred_fallthru
      _
    // Predicated region
    $region26: #{tpu_custom_call.1} parent=1 // pred_check
      _
    $region27: #{tpu_custom_call.1} parent=1 // pred_check_branch
      %104 = sbr.rel (0) target = $region29
    $region28: #{tpu_custom_call.1} parent=1 // pred_region
      %105 = dma.done [#allocation4], 256
    $region29: #{tpu_custom_call.1} parent=1 // pred_fallthru
      _
    %106 = vsyncpa [#allocation3], 1
    %107 = vsyncpa [#allocation6], 1
    %108 = vsyncpa [#allocation4], 1

</llo_original>
